<compile_context>
chip_gen: v6e
topology: v6e:2x2x1
jax: 0.10.0
libtpu: 0.0.40
codegen_flags: <defaults>
</compile_context>

<pallas_src>
import math
import functools

import jax
import jax.numpy as jnp
from jax import lax
from jax.experimental import pallas as pl
from jax.experimental.pallas import tpu as pltpu


def _round_up(x, m):
    return ((x + m - 1) // m) * m


def _embedding_vmem_kernel(ids_ref, tbl_ref, out_ref, *, tokens_per_tile, scale):
    """Small-vocab path: table resident in VMEM, rows gathered by dynamic slice."""
    base = pl.program_id(0) * tokens_per_tile

    def gather_row(t, carry):
        idx = ids_ref[base + t]                         # SMEM scalar read
        out_ref[pl.ds(t, 1), :] = tbl_ref[pl.ds(idx, 1), :]
        return carry

    lax.fori_loop(0, tokens_per_tile, gather_row, 0)
    # One dense (T, D) scale over the whole tile; multiply in f32 so bf16
    # tables round like table[ids].astype(f32) * sqrt(D).
    out_ref[...] = (out_ref[...].astype(jnp.float32) * scale).astype(out_ref.dtype)


def _embedding_hbm_kernel(ids_ref, tbl_hbm, out_ref, buf, sem, *,
                          tokens_per_tile, scale):
    """Large-vocab path: per-tile row-gather DMAs straight from the HBM table."""
    base = pl.program_id(0) * tokens_per_tile

    def issue_row(t, carry):
        idx = ids_ref[base + t]                         # SMEM scalar read
        pltpu.make_async_copy(
            tbl_hbm.at[pl.ds(idx, 1), :],               # (1, D) row in HBM
            buf.at[pl.ds(t, 1), :],                     # VMEM landing slot
            sem.at[t],
        ).start()
        return carry

    # Issue all T row copies before waiting on any: the kernel is HBM-latency
    # bound per row, so concurrency of outstanding DMAs is what matters.
    lax.fori_loop(0, tokens_per_tile, issue_row, 0)

    def wait_row(t, carry):
        pltpu.make_async_copy(
            tbl_hbm.at[pl.ds(0, 1), :],
            buf.at[pl.ds(t, 1), :],
            sem.at[t],
        ).wait()
        return carry

    lax.fori_loop(0, tokens_per_tile, wait_row, 0)

    out_ref[...] = (buf[...].astype(jnp.float32) * scale).astype(out_ref.dtype)


def embedding_forward(ids, table, *, tokens_per_tile=128,
                      vmem_table_bytes_limit=8 * 1024 * 1024):
    """Pallas equivalent of: nn.Embedding(V, D)(ids) * sqrt(D).

    ids   : (B, S) integer token ids
    table : (V, D) embedding table

    Notes:
      * Out-of-range ids are clamped (PyTorch raises) so an invalid id can
        never become an out-of-bounds DMA (TPU has no runtime bounds check).
      * `vmem_table_bytes_limit` selects the VMEM-resident fast path; the
        8 MiB default is v7x-safe (32 MiB scoped VMEM), raise toward 32-64 MiB
        on v5e/v6e if the vocab fits.
      * `tokens_per_tile` (128-512 typical) amortizes the ~0.35us per-step
        overhead; on v7x size T so the (T, D) buffers fit the 32 MiB scoped
        VMEM alongside the double-buffered output tiles.
    """
    B, S = ids.shape
    V, D = table.shape
    N = B * S
    scale = float(math.sqrt(D))
    itemsize = jnp.dtype(table.dtype).itemsize

    # Sublane-friendly tile: multiple of 8 (f32) / 16 (packed dtypes), no
    # bigger than the (rounded-up) token count.
    sub = 8 if itemsize >= 4 else 16
    T = max(sub, min(_round_up(tokens_per_tile, sub), _round_up(N, sub)))
    num_tiles = pl.cdiv(N, T)
    N_pad = num_tiles * T

    ids_flat = jnp.clip(ids.reshape(N).astype(jnp.int32), 0, V - 1)
    if N_pad != N:
        ids_flat = jnp.pad(ids_flat, (0, N_pad - N))    # padded ids gather row 0

    cost = pl.CostEstimate(
        flops=N * D,
        transcendentals=0,
        bytes_accessed=2 * N * D * itemsize + 4 * N,
    )
    compiler_params = pltpu.CompilerParams(
        # Every token tile only reads the table and writes its own output
        # block, so the tile axis is safely parallel (megacore / v7x 2-TC).
        dimension_semantics=("parallel",),
    )

    # TODO(synk): for tiny D (<128 lanes, e.g. the demo's D=32) the caller could
    # pad the table's last dim to a lane multiple for full-width transactions;
    # kept as-is here to avoid extra HBM traffic from pad/slice in the wrapper.

    if V * D * itemsize <= vmem_table_bytes_limit:
        # --- small-vocab fast path: table resident in VMEM -------------------
        kernel = functools.partial(
            _embedding_vmem_kernel, tokens_per_tile=T, scale=scale)
        out_flat = pl.pallas_call(
            kernel,
            out_shape=jax.ShapeDtypeStruct((N_pad, D), table.dtype),
            grid_spec=pltpu.PrefetchScalarGridSpec(
                num_scalar_prefetch=1,                  # ids -> SMEM
                grid=(num_tiles,),
                in_specs=[
                    # Constant index_map -> full table loaded into VMEM once
                    # and kept resident across all token tiles.
                    pl.BlockSpec((V, D), lambda g, ids: (0, 0)),
                ],
                out_specs=pl.BlockSpec((T, D), lambda g, ids: (g, 0)),
            ),
            compiler_params=compiler_params,
            cost_estimate=cost,
        )(ids_flat, table)
    else:
        # --- large-vocab path: row-gather DMAs from the HBM table ------------
        kernel = functools.partial(
            _embedding_hbm_kernel, tokens_per_tile=T, scale=scale)
        out_flat = pl.pallas_call(
            kernel,
            out_shape=jax.ShapeDtypeStruct((N_pad, D), table.dtype),
            grid_spec=pltpu.PrefetchScalarGridSpec(
                num_scalar_prefetch=1,                  # ids -> SMEM
                grid=(num_tiles,),
                in_specs=[
                    pl.BlockSpec(memory_space=pl.ANY),  # table stays in HBM
                ],
                out_specs=pl.BlockSpec((T, D), lambda g, ids: (g, 0)),
                scratch_shapes=[
                    pltpu.VMEM((T, D), table.dtype),    # gather landing buffer
                    pltpu.SemaphoreType.DMA((T,)),      # one sem per row DMA
                ],
            ),
            compiler_params=compiler_params,
            cost_estimate=cost,
        )(ids_flat, table)

    if N_pad != N:
        out_flat = out_flat[:N]
    return out_flat.reshape(B, S, D)


if __name__ == "__main__":
    vocab_size = 128
    emb_dim = 32
    batch = 2
    seq = 8

    key = jax.random.PRNGKey(0)
    k_ids, k_table = jax.random.split(key)

    # Deterministic "parameter" init (nn.Embedding default is N(0, 1)).
    table = jax.random.normal(k_table, (vocab_size, emb_dim), dtype=jnp.float32)
    ids = jax.random.randint(k_ids, (batch, seq), 0, vocab_size, dtype=jnp.int32)

    # Pure-JAX reference: table[ids] * sqrt(emb_dim)
    ref = jnp.take(table, ids, axis=0) * math.sqrt(emb_dim)

    # Small table (16 KiB) -> auto-dispatches to the VMEM-resident fast path.
    out_vmem = jax.block_until_ready(embedding_forward(ids, table))
    assert out_vmem.shape == (batch, seq, emb_dim)
    assert jnp.allclose(out_vmem, ref, atol=1e-5, rtol=1e-5)

    # Also force the large-vocab HBM row-gather path to exercise it.
    out_hbm = jax.block_until_ready(
        embedding_forward(ids, table, vmem_table_bytes_limit=0))
    assert out_hbm.shape == (batch, seq, emb_dim)
    assert jnp.allclose(out_hbm, ref, atol=1e-5, rtol=1e-5)

    print("KERNEL_OK")
</pallas_src>

<mosaic_0001>
module attributes {stable_mosaic.version = 11 : i64} {
  func.func @_embedding_vmem_kernel(%arg0: i32, %arg1: memref<16xi32, #tpu.memory_space<smem>>, %arg2: memref<128x32xf32, #tpu.memory_space<vmem>>, %arg3: memref<16x32xf32, #tpu.memory_space<vmem>>) attributes {dimension_semantics = [#tpu.dimension_semantics<parallel>], iteration_bounds = array<i64: 1>, scalar_prefetch = 1 : i64, scratch_operands = 0 : i64, tpu.core_type = #tpu.core_type<tc>, window_params = [{pipeline_mode = #tpu.pipeline_mode<synchronous>, transform_indices = @transform_0, window_bounds = array<i64: 128, 32>}, {transform_indices = @transform_1, window_bounds = array<i64: 16, 32>}]} {
    %c16_i32 = arith.constant 16 : i32
    %0 = arith.muli %arg0, %c16_i32 : i32
    %c0_i32 = arith.constant 0 : i32
    %c16_i32_0 = arith.constant 16 : i32
    %1 = arith.addi %c0_i32, %c16_i32_0 : i32
    %c1_i32 = arith.constant 1 : i32
    scf.for %arg4 = %c0_i32 to %1 step %c1_i32  : i32 {
      %6 = arith.addi %0, %arg4 : i32
      %7 = arith.index_cast %6 : i32 to index
      %8 = memref.load %arg1[%7] : memref<16xi32, #tpu.memory_space<smem>>
      %9 = arith.index_cast %8 : i32 to index
      %c0_5 = arith.constant 0 : index
      %10 = vector.load %arg2[%9, %c0_5] : memref<128x32xf32, #tpu.memory_space<vmem>>, vector<1x32xf32>
      %11 = arith.index_cast %arg4 : i32 to index
      %c0_6 = arith.constant 0 : index
      %12 = vector.load %arg3[%11, %c0_6] : memref<16x32xf32, #tpu.memory_space<vmem>>, vector<1x32xf32>
      tpu.vector_store %arg3[%11, %c0_6], %10 {strides = array<i32>} : memref<16x32xf32, #tpu.memory_space<vmem>>, vector<1x32xf32>,
    }
    %c16_i32_1 = arith.constant 16 : i32
    %c0 = arith.constant 0 : index
    %c0_2 = arith.constant 0 : index
    %2 = vector.load %arg3[%c0, %c0_2] : memref<16x32xf32, #tpu.memory_space<vmem>>, vector<16x32xf32>
    %cst = arith.constant 5.65685415 : f32
    %3 = vector.broadcast %cst : f32 to vector<16x32xf32>
    %4 = arith.mulf %2, %3 : vector<16x32xf32>
    %c0_3 = arith.constant 0 : index
    %c0_4 = arith.constant 0 : index
    %5 = vector.load %arg3[%c0_3, %c0_4] : memref<16x32xf32, #tpu.memory_space<vmem>>, vector<16x32xf32>
    tpu.vector_store %arg3[%c0_3, %c0_4], %4 {strides = array<i32>} : memref<16x32xf32, #tpu.memory_space<vmem>>, vector<16x32xf32>,
    return
  }
  func.func @transform_0(%arg0: i32, %arg1: memref<16xi32, #tpu.memory_space<smem>>) -> (i32, i32) {
    %c0_i32 = arith.constant 0 : i32
    %c0_i32_0 = arith.constant 0 : i32
    %c0_i32_1 = arith.constant 0 : i32
    return %c0_i32, %c0_i32_0 : i32, i32
  }
  func.func @transform_1(%arg0: i32, %arg1: memref<16xi32, #tpu.memory_space<smem>>) -> (i32, i32) {
    %c0_i32 = arith.constant 0 : i32
    %c0_i32_0 = arith.constant 0 : i32
    return %arg0, %c0_i32 : i32, i32
  }
}

</mosaic_0001>

<llo_original>
// kernel: tpu_custom_call.1
$region0: #{tpu_custom_call.1}
  #allocation0 [shape = 'u32[]', space=smem, size = 0x4, offset = 0x4, fixed_abs, tag = 'smem constant byte address 0x4 - core index']
  #allocation1 [shape = 'u32[144,128]{1,0:T(1,128)}', space=vmem, size = 0x12000, scoped, tag = 'internal scratch']
  #allocation2 [shape = 's32[1]{0}', space=sflag, size = 0x4, scoped, tag = 'scoped memory for tpu_custom_call.1']
  #allocation3 [shape = 'u8[512]{0}', space=smem, size = 0x200, scoped, tag = 'prefetched SMEM operand 0']
  %s0 = inlined_call_operand.vmem [shape: s32[16], index: 0, kind: input, shape index: {}]
  %s1 = inlined_call_operand.vmem [shape: f32[128,32], index: 1, kind: input, shape index: {}]
  %s2 = inlined_call_operand.hbm [shape: f32[16,32], index: 2, kind: output, shape index: {}]
  %s3 = sld [smem:[#allocation0]]
  $region21: #{tpu_custom_call.1} parent=0
    _
  %s5 = ssub.s32 1, %s3
  %s6 = scalar_select 0, %s5, %s3
  %s7 = sshll.u32 %s0, 4
  %s8 = int_to_ptr.vmem [resolvable:$true] %s7
  %10 = dma.vmem_to_smem %s8, 16, [#allocation3], [#allocation2]
  %11 = dma.done [#allocation2], 16
  %12 = sfence
  $region1: #{tpu_custom_call.1} parent=0
    #allocation4 [shape = 'u8[8192]{0}', space=vmem, size = 0x2000, scoped, tag = 'output window, operand 0, single buffered']
    #allocation5 [shape = 's32[1]{0}', space=sflag, size = 0x4, scoped, tag = 'scoped memory for tpu_custom_call.1']
    %13 = vsyncpa [#allocation5], 0
    // Predicated region
    $region2: #{tpu_custom_call.1} parent=1 // pred_check
      _
    $region3: #{tpu_custom_call.1} parent=1 // pred_check_branch
      %15 = sbr.rel (0) target = $region5
    $region4: #{tpu_custom_call.1} parent=1 // pred_region
      _
    $region5: #{tpu_custom_call.1} parent=1 // pred_fallthru
      _
    %s16 = smul.u32 0, 16
    loop: start=0, step=1, limit=16
    $region6: #{tpu_custom_call.1} parent=1 // loop_pre_header
      _
    $region7: #{tpu_custom_call.1} parent=1 // loop_header
      %s18 = sphi 0, %s22
      %p19 = scmp.ge.s32.totalorder %s18, 16
    $region8: #{tpu_custom_call.1} parent=1 // loop_header_branch
      %21 = sbr.rel (%p19) target = $region12
    $region9: #{tpu_custom_call.1} parent=1 // loop_body
      %s23 = sadd.s32 %s16, %s18
      %s24 = sld [smem:[#allocation3 + %s23]]
      %s25 = scalar_lea.vmem %s1, %s24
      %v26 = vld [vmem:[%s25] sm:$0x1]
      %s27 = scalar_lea.vmem [#allocation4], %s18
      %vm28 = vcmask 253952
      %29 = vst.msk [vmem:[%s27] sm:$0x1] %vm28, %v26
    $region10: #{tpu_custom_call.1} parent=1 // loop_footer
      %s22 = sadd.s32 1, %s18
    $region11: #{tpu_custom_call.1} parent=1 // loop_footer_branch
      %17 = sbr.rel target = $region7
    $region12: #{tpu_custom_call.1} parent=1 // loop_exit
      _
    %v30 = vld [vmem:[#allocation4] sm:$0xff]
    %v31 = vld [vmem:[#allocation4 + $0x8] sm:$0xff]
    %v32 = vmul.f32 %v30, 5.656854
    %v33 = vmul.f32 %v31, 5.656854
    %vm34 = vcmask 261120
    %35 = vst.msk [vmem:[#allocation4] sm:$0xff] %vm34, %v32
    %36 = vst.msk [vmem:[#allocation4 + $0x8] sm:$0xff] %vm34, %v33
    // Predicated region
    $region13: #{tpu_custom_call.1} parent=1 // pred_check
      _
    $region14: #{tpu_custom_call.1} parent=1 // pred_check_branch
      %38 = sbr.rel (0) target = $region16
    $region15: #{tpu_custom_call.1} parent=1 // pred_region
      %s40 = ssub.s32 256, 256
      %41 = vsyncadd [#allocation5], %s40
      %s42 = sshll.u32 [#allocation4], 4
      %s43 = int_to_ptr.vmem [resolvable:$true] %s42
      %48 = dma.vmem_to_hbm [thread:$0]  %s43, 256, %s2, [#allocation5], 128, 128, 8
    $region16: #{tpu_custom_call.1} parent=1 // pred_fallthru
      _
    // Predicated region
    $region17: #{tpu_custom_call.1} parent=1 // pred_check
      _
    $region18: #{tpu_custom_call.1} parent=1 // pred_check_branch
      %50 = sbr.rel (0) target = $region20
    $region19: #{tpu_custom_call.1} parent=1 // pred_region
      %51 = dma.done [#allocation5], 256
    $region20: #{tpu_custom_call.1} parent=1 // pred_fallthru
      _
    %52 = vsyncpa [#allocation5], 1

</llo_original>
